<compile_context>
chip_gen: v7x
topology: tpu7x:2x2x1
jax: 0.10.0
libtpu: 0.0.40
codegen_flags: <defaults>
</compile_context>

<pallas_src>
import jax
import jax.numpy as jnp
from jax import lax
from jax.experimental import pallas as pl
from jax.experimental.pallas import tpu as pltpu


_MIB = 1024 * 1024
# Switch from one-hot MXU gather to a real row gather well before the table
# stops fitting in VMEM (one-hot cost is O(T*A*E) MXU + O(T*A) VPU work).
_ONEHOT_MAX_ATTRS = 512
# Below this many tokens, kernel launch + padding dominate: use plain XLA gather.
_TINY_TOKEN_FALLBACK = 64


def _round_up(x, m):
    return ((x + m - 1) // m) * m


def _vmem_capacity_bytes():
    """Generation-aware VMEM size (128 MiB v5e/v6e, 64 MiB per-TC v7x)."""
    try:
        cap = int(getattr(pltpu.get_tpu_info(), "vmem_capacity_bytes"))
        if cap > 0:
            return cap
    except Exception:
        pass
    return 64 * _MIB  # conservative fallback (v7x per-TensorCore VMEM)


def _embed_onehot_kernel(idx_ref, tbl_ref, o_ref):
    """One token-tile of the embedding lookup via an exact one-hot MXU matmul.

    idx_ref: (1, T)  int32 attribute indices, lane-dense
    tbl_ref: (A, E)  embedding table (single-buffered, VMEM resident)
    o_ref:   (T, E)  gathered embeddings
    """
    idx = idx_ref[...]                                     # (1, T)
    a = tbl_ref.shape[0]
    t = o_ref.shape[0]
    # Transposed one-hot (A, T): tokens on the lane axis, A contracted by MXU.
    attr_ids = lax.broadcasted_iota(jnp.int32, (a, t), 0)
    onehot_t = (attr_ids == idx).astype(tbl_ref.dtype)     # (A, T)
    # out[t, e] = sum_a onehot_t[a, t] * tbl[a, e]; exactly one 1.0 per column,
    # accumulated in f32 -> matches a direct gather.
    gathered = lax.dot_general(
        onehot_t, tbl_ref[...],
        dimension_numbers=(((0,), (0,)), ((), ())),
        preferred_element_type=jnp.float32)
    o_ref[...] = gathered.astype(o_ref.dtype)


def _embed_rowgather_kernel(idx_sref, tbl_ref, o_ref):
    """One token-tile via a per-row dynamic-slice gather (large vocab path).

    idx_sref: (n_pad,) int32 in SMEM (scalar prefetch)
    tbl_ref:  (A, E)   embedding table (single-buffered, VMEM resident)
    o_ref:    (T, E)   gathered embeddings
    """
    tile = o_ref.shape[0]
    base = pl.program_id(0) * tile

    def body(t, carry):
        row = idx_sref[base + t]
        o_ref[pl.ds(t, 1), :] = tbl_ref[pl.ds(row, 1), :]
        return carry

    lax.fori_loop(0, tile, body, 0)


def attr_embedding_forward(x, table, *, tile_tokens=1024, table_in_bf16=False,
                           small_input_fallback=True):
    """Pallas equivalent of `AttrEmbedding.forward`: table[x].

    x:     integer indices, arbitrary shape (...)
    table: (n_attrs, embed_size) embedding weights
    returns: x.shape + (embed_size,) in table.dtype
    """
    n_attrs, embed = table.shape
    out_dtype = table.dtype
    if table_in_bf16 and table.dtype == jnp.float32:
        # Opt-in: halves table VMEM/HBM footprint, native-rate MXU; numerics change.
        table = table.astype(jnp.bfloat16)

    idx_flat = x.reshape(-1).astype(jnp.int32)
    n_tok = int(idx_flat.shape[0])

    if small_input_fallback and n_tok <= _TINY_TOKEN_FALLBACK:
        # Kernel launch / padding overhead dominates at this size.
        return jnp.take(table, x, axis=0).astype(out_dtype)

    itemsize = jnp.dtype(table.dtype).itemsize
    tbl_bytes = n_attrs * embed * itemsize            # single-buffered table
    use_onehot = n_attrs <= _ONEHOT_MAX_ATTRS

    cap = _vmem_capacity_bytes()
    budget = int(0.75 * cap)                          # ~96 MiB v5e/v6e, ~48 MiB v7x

    def per_tile_bytes(t):
        b = 2 * t * embed * itemsize                  # double-buffered out tile
        b += t * embed * 4                            # f32 accumulator / result
        if use_onehot:
            b += 2 * t * 4                            # double-buffered idx tile
            b += t * n_attrs * (itemsize + 4)         # one-hot + iota intermediates
        return b

    # Tile selection: big tiles for the HBM roofline, shrunk for the VMEM
    # budget (v7x has half the VMEM of v5e/v6e), and >=2 grid steps on
    # mid-size inputs so both v7x TensorCores get work.
    tile = max(8, min(tile_tokens, _round_up(n_tok, 8)))
    while tile > 128 and tbl_bytes + per_tile_bytes(tile) > budget:
        tile //= 2
    if n_tok > 256:
        while tile > 128 and _round_up(n_tok, tile) // tile < 2:
            tile //= 2
    tile = _round_up(tile, 8)

    n_pad = _round_up(n_tok, tile)
    if n_pad != n_tok:
        # Padded tokens gather row 0; they are sliced off before returning.
        idx_flat = jnp.pad(idx_flat, (0, n_pad - n_tok))
    grid = (n_pad // tile,)

    vmem_bytes = tbl_bytes + per_tile_bytes(tile) + 2 * _MIB
    vmem_limit = int(min(budget, max(32 * _MIB, 2 * vmem_bytes)))
    cparams = pltpu.CompilerParams(
        dimension_semantics=("parallel",),
        vmem_limit_bytes=vmem_limit)

    bytes_accessed = tbl_bytes + n_pad * 4 + n_pad * embed * itemsize
    cost = pl.CostEstimate(
        flops=(2 * n_pad * n_attrs * embed) if use_onehot else 0,
        transcendentals=0,
        bytes_accessed=bytes_accessed)

    if use_onehot:
        idx_arg = idx_flat.reshape(grid[0], tile)     # lane-dense index layout
        args = (idx_arg, table)

        def build(single_buffer_table):
            tbl_kwargs = ({"pipeline_mode": pl.Buffered(1)}
                          if single_buffer_table else {})
            return pl.pallas_call(
                _embed_onehot_kernel,
                out_shape=jax.ShapeDtypeStruct((n_pad, embed), table.dtype),
                grid_spec=pltpu.PrefetchScalarGridSpec(
                    num_scalar_prefetch=0,
                    grid=grid,
                    in_specs=[
                        pl.BlockSpec((1, tile), lambda i: (i, 0)),
                        pl.BlockSpec((n_attrs, embed), lambda i: (0, 0),
                                     **tbl_kwargs),
                    ],
                    out_specs=pl.BlockSpec((tile, embed), lambda i: (i, 0)),
                ),
                compiler_params=cparams,
                cost_estimate=cost,
            )
    else:
        args = (idx_flat, table)

        def build(single_buffer_table):
            tbl_kwargs = ({"pipeline_mode": pl.Buffered(1)}
                          if single_buffer_table else {})
            return pl.pallas_call(
                _embed_rowgather_kernel,
                out_shape=jax.ShapeDtypeStruct((n_pad, embed), table.dtype),
                grid_spec=pltpu.PrefetchScalarGridSpec(
                    num_scalar_prefetch=1,          # indices -> SMEM
                    grid=grid,
                    in_specs=[
                        pl.BlockSpec((n_attrs, embed), lambda i, idx: (0, 0),
                                     **tbl_kwargs),
                    ],
                    out_specs=pl.BlockSpec((tile, embed), lambda i, idx: (i, 0)),
                ),
                compiler_params=cparams,
                cost_estimate=cost,
            )

    try:
        out = build(True)(*args)
    except Exception:
        # Fallback if pipeline_mode=pl.Buffered(1) is unsupported on this JAX:
        # default double-buffered resident table (correct, just more VMEM).
        out = build(False)(*args)

    out = out[:n_tok].astype(out_dtype)
    return out.reshape(x.shape + (embed,))


def init_attr_embedding(key, n_attrs, embed_size, dtype=jnp.float32):
    """Mirrors nn.Embedding default init: weight ~ N(0, 1)."""
    return jax.random.normal(key, (n_attrs, embed_size), dtype=dtype)


if __name__ == "__main__":
    key = jax.random.PRNGKey(0)
    k_idx, k_tbl, k_idx2, k_tbl2 = jax.random.split(key, 4)

    # 1) Small shapes consistent with the module: batch=2, seq=8 attribute ids,
    #    n_attrs=16, embed_size=128. Force the Pallas one-hot path (the tiny-
    #    input fallback would otherwise bypass the kernel).
    n_attrs, embed_size = 16, 128
    B, S = 2, 8
    x = jax.random.randint(k_idx, (B, S), 0, n_attrs, dtype=jnp.int32)
    table = init_attr_embedding(k_tbl, n_attrs, embed_size, dtype=jnp.float32)

    out = jax.block_until_ready(
        attr_embedding_forward(x, table, small_input_fallback=False))
    ref = jnp.take(table, x, axis=0)
    assert out.shape == (B, S, embed_size)
    assert jnp.allclose(out, ref, atol=1e-6, rtol=1e-6), "onehot path mismatch"

    # 2) Larger token count: exercises padding, a multi-step grid (>=2 tiles for
    #    the megacore-parallel token axis) and default settings.
    x2 = jax.random.randint(k_idx2, (4, 500), 0, n_attrs, dtype=jnp.int32)
    out2 = jax.block_until_ready(attr_embedding_forward(x2, table))
    ref2 = jnp.take(table, x2, axis=0)
    assert out2.shape == (4, 500, embed_size)
    assert jnp.allclose(out2, ref2, atol=1e-6, rtol=1e-6), "tiled path mismatch"

    # 3) Large vocabulary: exercises the true row-gather (scalar-prefetch) path.
    n_big = 2048
    table_big = init_attr_embedding(k_tbl2, n_big, embed_size, dtype=jnp.float32)
    x3 = jax.random.randint(k_idx, (B, S), 0, n_big, dtype=jnp.int32)
    out3 = jax.block_until_ready(
        attr_embedding_forward(x3, table_big, small_input_fallback=False))
    ref3 = jnp.take(table_big, x3, axis=0)
    assert jnp.allclose(out3, ref3, atol=1e-6, rtol=1e-6), "gather path mismatch"

    print("KERNEL_OK")
</pallas_src>

<mosaic_0001>
module attributes {stable_mosaic.version = 11 : i64} {
  func.func @_embed_onehot_kernel(%arg0: i32, %arg1: memref<1x16xi32, #tpu.memory_space<vmem>>, %arg2: memref<16x128xf32, #tpu.memory_space<vmem>>, %arg3: memref<16x128xf32, #tpu.memory_space<vmem>>) attributes {dimension_semantics = [#tpu.dimension_semantics<parallel>], iteration_bounds = array<i64: 1>, scalar_prefetch = 0 : i64, scratch_operands = 0 : i64, tpu.core_type = #tpu.core_type<tc>, window_params = [{transform_indices = @transform_0, window_bounds = array<i64: 1, 16>}, {pipeline_mode = #tpu.pipeline_mode<synchronous>, transform_indices = @transform_1, window_bounds = array<i64: 16, 128>}, {transform_indices = @transform_2, window_bounds = array<i64: 16, 128>}]} {
    %c0 = arith.constant 0 : index
    %c0_0 = arith.constant 0 : index
    %0 = vector.load %arg1[%c0, %c0_0] : memref<1x16xi32, #tpu.memory_space<vmem>>, vector<1x16xi32>
    %1 = tpu.iota {dimensions = array<i32: 0>} : vector<16x16xi32>
    %2 = vector.broadcast %0 : vector<1x16xi32> to vector<16x16xi32>
    %3 = arith.cmpi eq, %1, %2 : vector<16x16xi32>
    %4 = arith.extui %3 : vector<16x16xi1> to vector<16x16xi32>
    %5 = arith.sitofp %4 : vector<16x16xi32> to vector<16x16xf32>
    %c0_1 = arith.constant 0 : index
    %c0_2 = arith.constant 0 : index
    %6 = vector.load %arg2[%c0_1, %c0_2] : memref<16x128xf32, #tpu.memory_space<vmem>>, vector<16x128xf32>
    %cst = arith.constant dense<0.000000e+00> : vector<16x128xf32>
    %7 = tpu.matmul %5, %6, %cst {dimension_numbers = #tpu.dot_dimension_numbers<[0], [0], [1], [1], [0, 1, 1, 1], [], []>} : vector<16x16xf32>, vector<16x128xf32>, vector<16x128xf32> -> vector<16x128xf32>
    %c0_3 = arith.constant 0 : index
    %c0_4 = arith.constant 0 : index
    %8 = vector.load %arg3[%c0_3, %c0_4] : memref<16x128xf32, #tpu.memory_space<vmem>>, vector<16x128xf32>
    tpu.vector_store %arg3[%c0_3, %c0_4], %7 {strides = array<i32>} : memref<16x128xf32, #tpu.memory_space<vmem>>, vector<16x128xf32>,
    return
  }
  func.func @transform_0(%arg0: i32) -> (i32, i32) {
    %c0_i32 = arith.constant 0 : i32
    %c0_i32_0 = arith.constant 0 : i32
    return %arg0, %c0_i32 : i32, i32
  }
  func.func @transform_1(%arg0: i32) -> (i32, i32) {
    %c0_i32 = arith.constant 0 : i32
    %c0_i32_0 = arith.constant 0 : i32
    %c0_i32_1 = arith.constant 0 : i32
    return %c0_i32, %c0_i32_0 : i32, i32
  }
  func.func @transform_2(%arg0: i32) -> (i32, i32) {
    %c0_i32 = arith.constant 0 : i32
    %c0_i32_0 = arith.constant 0 : i32
    return %arg0, %c0_i32 : i32, i32
  }
}

module attributes {stable_mosaic.version = 11 : i64} {
  func.func @_embed_onehot_kernel(%arg0: i32, %arg1: memref<1x16xi32, #tpu.memory_space<vmem>>, %arg2: memref<16x128xf32, #tpu.memory_space<vmem>>, %arg3: memref<16x128xf32, #tpu.memory_space<vmem>>) attributes {dimension_semantics = [#tpu.dimension_semantics<parallel>], iteration_bounds = array<i64: 1>, scalar_prefetch = 0 : i64, scratch_operands = 0 : i64, tpu.core_type = #tpu.core_type<tc>, window_params = [{transform_indices = @transform_0, window_bounds = array<i64: 1, 16>}, {pipeline_mode = #tpu.pipeline_mode<synchronous>, transform_indices = @transform_1, window_bounds = array<i64: 16, 128>}, {transform_indices = @transform_2, window_bounds = array<i64: 16, 128>}]} {
    %c0 = arith.constant 0 : index
    %c0_0 = arith.constant 0 : index
    %0 = vector.load %arg1[%c0, %c0_0] : memref<1x16xi32, #tpu.memory_space<vmem>>, vector<1x16xi32>
    %1 = tpu.iota {dimensions = array<i32: 0>} : vector<16x16xi32>
    %2 = vector.broadcast %0 : vector<1x16xi32> to vector<16x16xi32>
    %3 = arith.cmpi eq, %1, %2 : vector<16x16xi32>
    %4 = arith.extui %3 : vector<16x16xi1> to vector<16x16xi32>
    %5 = arith.sitofp %4 : vector<16x16xi32> to vector<16x16xf32>
    %c0_1 = arith.constant 0 : index
    %c0_2 = arith.constant 0 : index
    %6 = vector.load %arg2[%c0_1, %c0_2] : memref<16x128xf32, #tpu.memory_space<vmem>>, vector<16x128xf32>
    %cst = arith.constant dense<0.000000e+00> : vector<16x128xf32>
    %7 = tpu.matmul %5, %6, %cst {dimension_numbers = #tpu.dot_dimension_numbers<[0], [0], [1], [1], [0, 1, 1, 1], [], []>} : vector<16x16xf32>, vector<16x128xf32>, vector<16x128xf32> -> vector<16x128xf32>
    %c0_3 = arith.constant 0 : index
    %c0_4 = arith.constant 0 : index
    %8 = vector.load %arg3[%c0_3, %c0_4] : memref<16x128xf32, #tpu.memory_space<vmem>>, vector<16x128xf32>
    tpu.vector_store %arg3[%c0_3, %c0_4], %7 {strides = array<i32>} : memref<16x128xf32, #tpu.memory_space<vmem>>, vector<16x128xf32>,
    return
  }
  func.func @transform_0(%arg0: i32) -> (i32, i32) {
    %c0_i32 = arith.constant 0 : i32
    %c0_i32_0 = arith.constant 0 : i32
    return %arg0, %c0_i32 : i32, i32
  }
  func.func @transform_1(%arg0: i32) -> (i32, i32) {
    %c0_i32 = arith.constant 0 : i32
    %c0_i32_0 = arith.constant 0 : i32
    %c0_i32_1 = arith.constant 0 : i32
    return %c0_i32, %c0_i32_0 : i32, i32
  }
  func.func @transform_2(%arg0: i32) -> (i32, i32) {
    %c0_i32 = arith.constant 0 : i32
    %c0_i32_0 = arith.constant 0 : i32
    return %arg0, %c0_i32 : i32, i32
  }
}

</mosaic_0001>

<llo_original>
// kernel: tpu_custom_call.1
$region0: #{tpu_custom_call.1}
  #allocation0 [shape = 'u32[]', space=smem, size = 0x4, offset = 0x4, fixed_abs, tag = 'smem constant byte address 0x4 - core index']
  #allocation1 [shape = 'u32[144,128]{1,0:T(1,128)}', space=vmem, size = 0x12000, scoped, tag = 'internal scratch']
  %s0 = inlined_call_operand.hbm [shape: s32[1,16], index: 0, kind: input, shape index: {}]
  %s1 = inlined_call_operand.hbm [shape: f32[16,128], index: 1, kind: input, shape index: {}]
  %s2 = inlined_call_operand.hbm [shape: f32[16,128], index: 2, kind: output, shape index: {}]
  %s3 = sld [smem:[#allocation0]]
  $region26: #{tpu_custom_call.1} parent=0
    _
  %s5 = ssub.s32 1, %s3
  %s6 = scalar_select 0, %s5, %s3
  $region1: #{tpu_custom_call.1} parent=0
    #allocation2 [shape = 'u8[512]{0}', space=vmem, size = 0x400, scoped, tag = 'input window, operand 0, single buffered']
    #allocation3 [shape = 's32[1]{0}', space=sflag, size = 0x4, scoped, tag = 'scoped memory for tpu_custom_call.1']
    #allocation4 [shape = 's32[1]{0}', space=sflag, size = 0x4, scoped, tag = 'scoped memory for tpu_custom_call.1']
    #allocation5 [shape = 'u8[8192]{0}', space=vmem, size = 0x2000, scoped, tag = 'input window, operand 1, single buffered']
    #allocation6 [shape = 's32[1]{0}', space=sflag, size = 0x4, scoped, tag = 'scoped memory for tpu_custom_call.1']
    #allocation7 [shape = 'u8[8192]{0}', space=vmem, size = 0x2000, scoped, tag = 'output window, operand 0, single buffered']
    %7 = vsyncpa [#allocation3], 0
    %8 = vsyncpa [#allocation6], 0
    %9 = vsyncpa [#allocation4], 0
    // Predicated region
    $region2: #{tpu_custom_call.1} parent=1 // pred_check
      _
    $region3: #{tpu_custom_call.1} parent=1 // pred_check_branch
      %11 = sbr.rel (0) target = $region5
    $region4: #{tpu_custom_call.1} parent=1 // pred_region
      %s13 = ssub.s32 16, 16
      %14 = vsyncadd [#allocation3], %s13
      %s16 = sshll.u32 [#allocation2], 4
      %s17 = int_to_ptr.vmem [resolvable:$true] %s16
      %19 = dma.hbm_to_vmem [thread:$0]  %s0, 16, %s17, [#allocation3]
    $region5: #{tpu_custom_call.1} parent=1 // pred_fallthru
      _
    // Predicated region
    $region6: #{tpu_custom_call.1} parent=1 // pred_check
      _
    $region7: #{tpu_custom_call.1} parent=1 // pred_check_branch
      %21 = sbr.rel (0) target = $region9
    $region8: #{tpu_custom_call.1} parent=1 // pred_region
      %s23 = ssub.s32 256, 256
      %24 = vsyncadd [#allocation6], %s23
      %s25 = sshll.u32 [#allocation5], 4
      %s26 = int_to_ptr.vmem [resolvable:$true] %s25
      %31 = dma.hbm_to_vmem [thread:$0]  %s1, 256, %s26, [#allocation6], 128, 128, 8
    $region9: #{tpu_custom_call.1} parent=1 // pred_fallthru
      _
    // Predicated region
    $region10: #{tpu_custom_call.1} parent=1 // pred_check
      _
    $region11: #{tpu_custom_call.1} parent=1 // pred_check_branch
      %33 = sbr.rel (0) target = $region13
    $region12: #{tpu_custom_call.1} parent=1 // pred_region
      %34 = dma.done [#allocation3], 16
    $region13: #{tpu_custom_call.1} parent=1 // pred_fallthru
      _
    // Predicated region
    $region14: #{tpu_custom_call.1} parent=1 // pred_check
      _
    $region15: #{tpu_custom_call.1} parent=1 // pred_check_branch
      %36 = sbr.rel (0) target = $region17
    $region16: #{tpu_custom_call.1} parent=1 // pred_region
      %37 = dma.done [#allocation6], 256
    $region17: #{tpu_custom_call.1} parent=1 // pred_fallthru
      _
    %v38 = vld [vmem:[#allocation2] sm:$0x1]
    %v39 = vlaneseq
    %v40 = vshrl.u32 %v39, 7
    %v41 = vadd.s32 %v40, 8
    %v42 = vlaneseq
    %v43 = vshrl.u32 %v42, 7
    %v44 = vsub.s32 0, %v43
    %v45 = vrot.slane %v38, %v44
    %vm46 = vcmp.eq.s32.totalorder %v40, %v45
    %vm47 = vcmp.eq.s32.totalorder %v41, %v45
    %v48 = vsel %vm46, 1, 0
    %v49 = vsel %vm47, 1, 0
    %v50 = vcvt.s32.f32 %v48
    %v51 = vcvt.s32.f32 %v49
    %v52 = vld [vmem:[#allocation5] sm:$0xff]
    %v53 = vld [vmem:[#allocation5 + $0x8] sm:$0xff]
    %54 = vxpose.xlu0.b32.start [1/16] %v50, 128
    %55 = vxpose.xlu0.b32.cont [2/16] %v51, 128
    %56 = vxpose.xlu0.b32.cont [3/16] 0.0, 128
    %57 = vxpose.xlu0.b32.cont [4/16] 0.0, 128
    %58 = vxpose.xlu0.b32.cont [5/16] 0.0, 128
    %59 = vxpose.xlu0.b32.cont [6/16] 0.0, 128
    %60 = vxpose.xlu0.b32.cont [7/16] 0.0, 128
    %61 = vxpose.xlu0.b32.cont [8/16] 0.0, 128
    %62 = vxpose.xlu0.b32.cont [9/16] 0.0, 128
    %63 = vxpose.xlu0.b32.cont [10/16] 0.0, 128
    %64 = vxpose.xlu0.b32.cont [11/16] 0.0, 128
    %65 = vxpose.xlu0.b32.cont [12/16] 0.0, 128
    %66 = vxpose.xlu0.b32.cont [13/16] 0.0, 128
    %67 = vxpose.xlu0.b32.cont [14/16] 0.0, 128
    %68 = vxpose.xlu0.b32.cont [15/16] 0.0, 128
    %69 = vxpose.xlu0.b32.end [16/16] 0.0, 128
    %v70 = vpop.trf.xlu0
    %v71 = vpop.trf.xlu0
    %v72 = vpop.trf.xlu0
    %v73 = vpop.trf.xlu0
    %v74 = vpop.trf.xlu0
    %v75 = vpop.trf.xlu0
    %v76 = vpop.trf.xlu0
    %v77 = vpop.trf.xlu0
    %v78 = vpop.trf.xlu0
    %v79 = vpop.trf.xlu0
    %v80 = vpop.trf.xlu0
    %v81 = vpop.trf.xlu0
    %v82 = vpop.trf.xlu0
    %v83 = vpop.trf.xlu0
    %v84 = vpop.trf.xlu0
    %v85 = vpop.trf.xlu0
    %vm86 = vcmask 130048
    %v88 = vsel %vm86, %v70, 0
    %v91 = vsel %vm86, %v71, 0
    %93 = vmatprep.subr.mxu0 0.0
    %94 = vmatpush1.msra.mxu0 %v52
    %95 = vmatprep.subr.mxu0 0.0
    %96 = vmatpush1.msra.mxu0 %v53
    %97 = vmatprep.subr.mxu0 0.0
    %98 = vmatpush1.msra.mxu0 0.0
    %99 = vmatprep.subr.mxu0 0.0
    %100 = vmatpush1.msra.mxu0 0.0
    %101 = vmatprep.subr.mxu0 0.0
    %102 = vmatpush1.msra.mxu0 0.0
    %103 = vmatprep.subr.mxu0 0.0
    %104 = vmatpush1.msra.mxu0 0.0
    %105 = vmatprep.subr.mxu0 0.0
    %106 = vmatpush1.msra.mxu0 0.0
    %107 = vmatprep.subr.mxu0 0.0
    %108 = vmatpush1.msra.mxu0 0.0
    %109 = vmatprep.subr.mxu0 0.0
    %110 = vmatpush1.msra.mxu0 0.0
    %111 = vmatprep.subr.mxu0 0.0
    %112 = vmatpush1.msra.mxu0 0.0
    %113 = vmatprep.subr.mxu0 0.0
    %114 = vmatpush1.msra.mxu0 0.0
    %115 = vmatprep.subr.mxu0 0.0
    %116 = vmatpush1.msra.mxu0 0.0
    %117 = vmatprep.subr.mxu0 0.0
    %118 = vmatpush1.msra.mxu0 0.0
    %119 = vmatprep.subr.mxu0 0.0
    %120 = vmatpush1.msra.mxu0 0.0
    %121 = vmatprep.subr.mxu0 0.0
    %122 = vmatpush1.msra.mxu0 0.0
    %123 = vmatprep.subr.mxu0 0.0
    %124 = vmatpush1.msra.mxu0 0.0
    %125 = vmatprep.subr.mxu0 0.0
    %126 = vmatpush1.msra.mxu0 0.0
    %127 = vmatprep.subr.mxu0 0.0
    %128 = vmatpush1.msra.mxu0 0.0
    %129 = vmatprep.subr.mxu0 0.0
    %130 = vmatpush1.msra.mxu0 0.0
    %131 = vmatprep.subr.mxu0 0.0
    %132 = vmatpush1.msra.mxu0 0.0
    %133 = vmatprep.subr.mxu0 0.0
    %134 = vmatpush1.msra.mxu0 0.0
    %135 = vmatprep.subr.mxu0 0.0
    %136 = vmatpush1.msra.mxu0 0.0
    %137 = vmatprep.subr.mxu0 0.0
    %138 = vmatpush1.msra.mxu0 0.0
    %139 = vmatprep.subr.mxu0 0.0
    %140 = vmatpush1.msra.mxu0 0.0
    %141 = vmatprep.subr.mxu0 0.0
    %142 = vmatpush1.msra.mxu0 0.0
    %143 = vmatprep.subr.mxu0 0.0
    %144 = vmatpush1.msra.mxu0 0.0
    %145 = vmatprep.subr.mxu0 0.0
    %146 = vmatpush1.msra.mxu0 0.0
    %147 = vmatprep.subr.mxu0 0.0
    %148 = vmatpush1.msra.mxu0 0.0
    %149 = vmatprep.subr.mxu0 0.0
    %150 = vmatpush1.msra.mxu0 0.0
    %151 = vmatprep.subr.mxu0 0.0
    %152 = vmatpush1.msra.mxu0 0.0
    %153 = vmatprep.subr.mxu0 0.0
    %154 = vmatpush1.msra.mxu0 0.0
    %155 = vmatprep.subr.mxu0 0.0
    %156 = vmatpush1.msra.mxu0 0.0
    %157 = vmatprep.mubr.f32.mxu0 0.0
    %158 = vmatmul.mubr.f32.gmra.mrb[0].mxu0 %v88
    %v159 = vpop.f32.mrb[0].mxu0
    %v160 = vadd.f32 0.0, %v159
    %v161 = vpop.f32.mrb[0].mxu0
    %162 = vmatprep.mubr.f32.mxu0 0.0
    %163 = vmatmul.mubr.f32.gmra.mrb[0].mxu0 %v91
    %v164 = vpop.f32.mrb[0].mxu0
    %v165 = vadd.f32 0.0, %v164
    %v166 = vpop.f32.mrb[0].mxu0
    %167 = vdwg.mxu0
    %168 = vst [vmem:[#allocation7] sm:$0xff] %v160
    %169 = vst [vmem:[#allocation7 + $0x8] sm:$0xff] %v165
    // Predicated region
    $region18: #{tpu_custom_call.1} parent=1 // pred_check
      _
    $region19: #{tpu_custom_call.1} parent=1 // pred_check_branch
      %171 = sbr.rel (0) target = $region21
    $region20: #{tpu_custom_call.1} parent=1 // pred_region
      %s173 = ssub.s32 256, 256
      %174 = vsyncadd [#allocation4], %s173
      %s175 = sshll.u32 [#allocation7], 4
      %s176 = int_to_ptr.vmem [resolvable:$true] %s175
      %181 = dma.vmem_to_hbm [thread:$0]  %s176, 256, %s2, [#allocation4], 128, 128, 8
    $region21: #{tpu_custom_call.1} parent=1 // pred_fallthru
      _
    // Predicated region
    $region22: #{tpu_custom_call.1} parent=1 // pred_check
      _
    $region23: #{tpu_custom_call.1} parent=1 // pred_check_branch
      %183 = sbr.rel (0) target = $region25
    $region24: #{tpu_custom_call.1} parent=1 // pred_region
      %184 = dma.done [#allocation4], 256
    $region25: #{tpu_custom_call.1} parent=1 // pred_fallthru
      _
    %185 = vsyncpa [#allocation3], 1
    %186 = vsyncpa [#allocation6], 1
    %187 = vsyncpa [#allocation4], 1

// kernel: tpu_custom_call.1
$region0: #{tpu_custom_call.1}
  #allocation0 [shape = 'u32[]', space=smem, size = 0x4, offset = 0x4, fixed_abs, tag = 'smem constant byte address 0x4 - core index']
  #allocation1 [shape = 'u32[144,128]{1,0:T(1,128)}', space=vmem, size = 0x12000, scoped, tag = 'internal scratch']
  %s0 = inlined_call_operand.hbm [shape: s32[1,16], index: 0, kind: input, shape index: {}]
  %s1 = inlined_call_operand.hbm [shape: f32[16,128], index: 1, kind: input, shape index: {}]
  %s2 = inlined_call_operand.hbm [shape: f32[16,128], index: 2, kind: output, shape index: {}]
  %s3 = sld [smem:[#allocation0]]
  $region26: #{tpu_custom_call.1} parent=0
    _
  %s5 = ssub.s32 1, %s3
  %s6 = scalar_select 0, %s5, %s3
  $region1: #{tpu_custom_call.1} parent=0
    #allocation2 [shape = 'u8[512]{0}', space=vmem, size = 0x400, scoped, tag = 'input window, operand 0, single buffered']
    #allocation3 [shape = 's32[1]{0}', space=sflag, size = 0x4, scoped, tag = 'scoped memory for tpu_custom_call.1']
    #allocation4 [shape = 's32[1]{0}', space=sflag, size = 0x4, scoped, tag = 'scoped memory for tpu_custom_call.1']
    #allocation5 [shape = 'u8[8192]{0}', space=vmem, size = 0x2000, scoped, tag = 'input window, operand 1, single buffered']
    #allocation6 [shape = 's32[1]{0}', space=sflag, size = 0x4, scoped, tag = 'scoped memory for tpu_custom_call.1']
    #allocation7 [shape = 'u8[8192]{0}', space=vmem, size = 0x2000, scoped, tag = 'output window, operand 0, single buffered']
    %7 = vsyncpa [#allocation3], 0
    %8 = vsyncpa [#allocation6], 0
    %9 = vsyncpa [#allocation4], 0
    // Predicated region
    $region2: #{tpu_custom_call.1} parent=1 // pred_check
      _
    $region3: #{tpu_custom_call.1} parent=1 // pred_check_branch
      %11 = sbr.rel (0) target = $region5
    $region4: #{tpu_custom_call.1} parent=1 // pred_region
      %s13 = ssub.s32 16, 16
      %14 = vsyncadd [#allocation3], %s13
      %s16 = sshll.u32 [#allocation2], 4
      %s17 = int_to_ptr.vmem [resolvable:$true] %s16
      %19 = dma.hbm_to_vmem [thread:$0]  %s0, 16, %s17, [#allocation3]
    $region5: #{tpu_custom_call.1} parent=1 // pred_fallthru
      _
    // Predicated region
    $region6: #{tpu_custom_call.1} parent=1 // pred_check
      _
    $region7: #{tpu_custom_call.1} parent=1 // pred_check_branch
      %21 = sbr.rel (0) target = $region9
    $region8: #{tpu_custom_call.1} parent=1 // pred_region
      %s23 = ssub.s32 256, 256
      %24 = vsyncadd [#allocation6], %s23
      %s25 = sshll.u32 [#allocation5], 4
      %s26 = int_to_ptr.vmem [resolvable:$true] %s25
      %31 = dma.hbm_to_vmem [thread:$0]  %s1, 256, %s26, [#allocation6], 128, 128, 8
    $region9: #{tpu_custom_call.1} parent=1 // pred_fallthru
      _
    // Predicated region
    $region10: #{tpu_custom_call.1} parent=1 // pred_check
      _
    $region11: #{tpu_custom_call.1} parent=1 // pred_check_branch
      %33 = sbr.rel (0) target = $region13
    $region12: #{tpu_custom_call.1} parent=1 // pred_region
      %34 = dma.done [#allocation3], 16
    $region13: #{tpu_custom_call.1} parent=1 // pred_fallthru
      _
    // Predicated region
    $region14: #{tpu_custom_call.1} parent=1 // pred_check
      _
    $region15: #{tpu_custom_call.1} parent=1 // pred_check_branch
      %36 = sbr.rel (0) target = $region17
    $region16: #{tpu_custom_call.1} parent=1 // pred_region
      %37 = dma.done [#allocation6], 256
    $region17: #{tpu_custom_call.1} parent=1 // pred_fallthru
      _
    %v38 = vld [vmem:[#allocation2] sm:$0x1]
    %v39 = vlaneseq
    %v40 = vshrl.u32 %v39, 7
    %v41 = vadd.s32 %v40, 8
    %v42 = vlaneseq
    %v43 = vshrl.u32 %v42, 7
    %v44 = vsub.s32 0, %v43
    %v45 = vrot.slane %v38, %v44
    %vm46 = vcmp.eq.s32.totalorder %v40, %v45
    %vm47 = vcmp.eq.s32.totalorder %v41, %v45
    %v48 = vsel %vm46, 1, 0
    %v49 = vsel %vm47, 1, 0
    %v50 = vcvt.s32.f32 %v48
    %v51 = vcvt.s32.f32 %v49
    %v52 = vld [vmem:[#allocation5] sm:$0xff]
    %v53 = vld [vmem:[#allocation5 + $0x8] sm:$0xff]
    %54 = vxpose.xlu0.b32.start [1/16] %v50, 128
    %55 = vxpose.xlu0.b32.cont [2/16] %v51, 128
    %56 = vxpose.xlu0.b32.cont [3/16] 0.0, 128
    %57 = vxpose.xlu0.b32.cont [4/16] 0.0, 128
    %58 = vxpose.xlu0.b32.cont [5/16] 0.0, 128
    %59 = vxpose.xlu0.b32.cont [6/16] 0.0, 128
    %60 = vxpose.xlu0.b32.cont [7/16] 0.0, 128
    %61 = vxpose.xlu0.b32.cont [8/16] 0.0, 128
    %62 = vxpose.xlu0.b32.cont [9/16] 0.0, 128
    %63 = vxpose.xlu0.b32.cont [10/16] 0.0, 128
    %64 = vxpose.xlu0.b32.cont [11/16] 0.0, 128
    %65 = vxpose.xlu0.b32.cont [12/16] 0.0, 128
    %66 = vxpose.xlu0.b32.cont [13/16] 0.0, 128
    %67 = vxpose.xlu0.b32.cont [14/16] 0.0, 128
    %68 = vxpose.xlu0.b32.cont [15/16] 0.0, 128
    %69 = vxpose.xlu0.b32.end [16/16] 0.0, 128
    %v70 = vpop.trf.xlu0
    %v71 = vpop.trf.xlu0
    %v72 = vpop.trf.xlu0
    %v73 = vpop.trf.xlu0
    %v74 = vpop.trf.xlu0
    %v75 = vpop.trf.xlu0
    %v76 = vpop.trf.xlu0
    %v77 = vpop.trf.xlu0
    %v78 = vpop.trf.xlu0
    %v79 = vpop.trf.xlu0
    %v80 = vpop.trf.xlu0
    %v81 = vpop.trf.xlu0
    %v82 = vpop.trf.xlu0
    %v83 = vpop.trf.xlu0
    %v84 = vpop.trf.xlu0
    %v85 = vpop.trf.xlu0
    %vm86 = vcmask 130048
    %v88 = vsel %vm86, %v70, 0
    %v91 = vsel %vm86, %v71, 0
    %93 = vmatprep.subr.mxu0 0.0
    %94 = vmatpush1.msra.mxu0 %v52
    %95 = vmatprep.subr.mxu0 0.0
    %96 = vmatpush1.msra.mxu0 %v53
    %97 = vmatprep.subr.mxu0 0.0
    %98 = vmatpush1.msra.mxu0 0.0
    %99 = vmatprep.subr.mxu0 0.0
    %100 = vmatpush1.msra.mxu0 0.0
    %101 = vmatprep.subr.mxu0 0.0
    %102 = vmatpush1.msra.mxu0 0.0
    %103 = vmatprep.subr.mxu0 0.0
    %104 = vmatpush1.msra.mxu0 0.0
    %105 = vmatprep.subr.mxu0 0.0
    %106 = vmatpush1.msra.mxu0 0.0
    %107 = vmatprep.subr.mxu0 0.0
    %108 = vmatpush1.msra.mxu0 0.0
    %109 = vmatprep.subr.mxu0 0.0
    %110 = vmatpush1.msra.mxu0 0.0
    %111 = vmatprep.subr.mxu0 0.0
    %112 = vmatpush1.msra.mxu0 0.0
    %113 = vmatprep.subr.mxu0 0.0
    %114 = vmatpush1.msra.mxu0 0.0
    %115 = vmatprep.subr.mxu0 0.0
    %116 = vmatpush1.msra.mxu0 0.0
    %117 = vmatprep.subr.mxu0 0.0
    %118 = vmatpush1.msra.mxu0 0.0
    %119 = vmatprep.subr.mxu0 0.0
    %120 = vmatpush1.msra.mxu0 0.0
    %121 = vmatprep.subr.mxu0 0.0
    %122 = vmatpush1.msra.mxu0 0.0
    %123 = vmatprep.subr.mxu0 0.0
    %124 = vmatpush1.msra.mxu0 0.0
    %125 = vmatprep.subr.mxu0 0.0
    %126 = vmatpush1.msra.mxu0 0.0
    %127 = vmatprep.subr.mxu0 0.0
    %128 = vmatpush1.msra.mxu0 0.0
    %129 = vmatprep.subr.mxu0 0.0
    %130 = vmatpush1.msra.mxu0 0.0
    %131 = vmatprep.subr.mxu0 0.0
    %132 = vmatpush1.msra.mxu0 0.0
    %133 = vmatprep.subr.mxu0 0.0
    %134 = vmatpush1.msra.mxu0 0.0
    %135 = vmatprep.subr.mxu0 0.0
    %136 = vmatpush1.msra.mxu0 0.0
    %137 = vmatprep.subr.mxu0 0.0
    %138 = vmatpush1.msra.mxu0 0.0
    %139 = vmatprep.subr.mxu0 0.0
    %140 = vmatpush1.msra.mxu0 0.0
    %141 = vmatprep.subr.mxu0 0.0
    %142 = vmatpush1.msra.mxu0 0.0
    %143 = vmatprep.subr.mxu0 0.0
    %144 = vmatpush1.msra.mxu0 0.0
    %145 = vmatprep.subr.mxu0 0.0
    %146 = vmatpush1.msra.mxu0 0.0
    %147 = vmatprep.subr.mxu0 0.0
    %148 = vmatpush1.msra.mxu0 0.0
    %149 = vmatprep.subr.mxu0 0.0
    %150 = vmatpush1.msra.mxu0 0.0
    %151 = vmatprep.subr.mxu0 0.0
    %152 = vmatpush1.msra.mxu0 0.0
    %153 = vmatprep.subr.mxu0 0.0
    %154 = vmatpush1.msra.mxu0 0.0
    %155 = vmatprep.subr.mxu0 0.0
    %156 = vmatpush1.msra.mxu0 0.0
    %157 = vmatprep.mubr.f32.mxu0 0.0
    %158 = vmatmul.mubr.f32.gmra.mrb[0].mxu0 %v88
    %v159 = vpop.f32.mrb[0].mxu0
    %v160 = vadd.f32 0.0, %v159
    %v161 = vpop.f32.mrb[0].mxu0
    %162 = vmatprep.mubr.f32.mxu0 0.0
    %163 = vmatmul.mubr.f32.gmra.mrb[0].mxu0 %v91
    %v164 = vpop.f32.mrb[0].mxu0
    %v165 = vadd.f32 0.0, %v164
    %v166 = vpop.f32.mrb[0].mxu0
    %167 = vdwg.mxu0
    %168 = vst [vmem:[#allocation7] sm:$0xff] %v160
    %169 = vst [vmem:[#allocation7 + $0x8] sm:$0xff] %v165
    // Predicated region
    $region18: #{tpu_custom_call.1} parent=1 // pred_check
      _
    $region19: #{tpu_custom_call.1} parent=1 // pred_check_branch
      %171 = sbr.rel (0) target = $region21
    $region20: #{tpu_custom_call.1} parent=1 // pred_region
      %s173 = ssub.s32 256, 256
      %174 = vsyncadd [#allocation4], %s173
      %s175 = sshll.u32 [#allocation7], 4
      %s176 = int_to_ptr.vmem [resolvable:$true] %s175
      %181 = dma.vmem_to_hbm [thread:$0]  %s176, 256, %s2, [#allocation4], 128, 128, 8
    $region21: #{tpu_custom_call.1} parent=1 // pred_fallthru
      _
    // Predicated region
    $region22: #{tpu_custom_call.1} parent=1 // pred_check
      _
    $region23: #{tpu_custom_call.1} parent=1 // pred_check_branch
      %183 = sbr.rel (0) target = $region25
    $region24: #{tpu_custom_call.1} parent=1 // pred_region
      %184 = dma.done [#allocation4], 256
    $region25: #{tpu_custom_call.1} parent=1 // pred_fallthru
      _
    %185 = vsyncpa [#allocation3], 1
    %186 = vsyncpa [#allocation6], 1
    %187 = vsyncpa [#allocation4], 1

</llo_original>
